<compile_context>
chip_gen: v6e
topology: v6e:2x2x1
jax: 0.10.0
libtpu: 0.0.40
codegen_flags: <defaults>
</compile_context>

<pallas_src>
import functools

import jax
import jax.numpy as jnp
from jax.experimental import pallas as pl
from jax.experimental.pallas import tpu as pltpu


_HIGHEST = jax.lax.Precision.HIGHEST
_SQRT_HALF = 0.7071067811865476
_SQRT_2_OVER_PI = 0.7978845608028654


# ------------------------------------------------------------------
# GELU variants (element-wise math in f32 -- safe on v5e as well).
# ------------------------------------------------------------------
def _erf(x):
    # Abramowitz & Stegun 7.1.26, |abs err| < 1.5e-7.  Uses an exact divide
    # (NOT pl.reciprocal(approx=True): the approximate reciprocal introduced
    # ~1e-3-level GELU error and failed the f32 check).
    a1 = 0.254829592
    a2 = -0.284496736
    a3 = 1.421413741
    a4 = -1.453152027
    a5 = 1.061405429
    p = 0.3275911
    sign = jnp.where(x >= 0.0, 1.0, -1.0)
    ax = jnp.abs(x)
    t = 1.0 / (1.0 + p * ax)
    poly = ((((a5 * t + a4) * t + a3) * t + a2) * t + a1) * t
    return sign * (1.0 - poly * jnp.exp(-ax * ax))


def _gelu_erf(x):
    # matches torch.nn.GELU() (approximate='none') to ~1e-6
    return 0.5 * x * (1.0 + _erf(x * _SQRT_HALF))


def _gelu_tanh(x):
    # torch GELU(approximate='tanh'): 1 EUP tanh + a handful of VALU ops.
    # ~2x fewer ops on the binding unit (VALU); |gelu err| < ~5e-4.
    return 0.5 * x * (1.0 + jnp.tanh(_SQRT_2_OVER_PI * x * (1.0 + 0.044715 * x * x)))


_GELUS = {"erf": _gelu_erf, "tanh": _gelu_tanh}


# ------------------------------------------------------------------
# Main vector-field MLP kernel.  Activations live in a transposed,
# lane-dense (feature, tile_cols) layout so the GELU runs on full vregs;
# the input/output layout changes are folded into the MXU matmuls.
#   te1_ref : (1, H, 1)        (te @ W1t + b1)^T for batch b   (f32)
#   z_ref   : (1, TL, D)       z tile, natural layout          (input dtype)
#   w1_ref  : (H, D)           W1z^T                           (compute dtype)
#   w2_ref  : (H, H)           W2^T                            (compute dtype)
#   b2_ref  : (H, 1)           b2^T                            (f32)
#   w3_ref  : (H, D)           W3 (natural)                    (compute dtype)
#   b3_ref  : (1, D)           b3 (natural)                    (f32)
#   o_ref   : (1, TL, D)       v tile, natural layout          (output dtype)
# ------------------------------------------------------------------
def net_kernel(te1_ref, z_ref, w1_ref, w2_ref, b2_ref, w3_ref, b3_ref, o_ref,
               *, gelu):
    cdt = w1_ref.dtype
    z_tile = z_ref[0].astype(cdt)                    # (TL, D)
    te1 = te1_ref[0]                                 # (H, 1), broadcast over lanes

    # Layer 1: h^T = W1z^T @ z^T + (te @ W1t + b1)^T   -> (H, TL)
    # NT dot_general: the transpose of z is handled by the MXU, not the XLU/VALU.
    h = jax.lax.dot_general(w1_ref[...], z_tile,
                            (((1,), (1,)), ((), ())),
                            preferred_element_type=jnp.float32) + te1
    h = gelu(h)

    # Layer 2: W2^T @ h + b2^T   -> (H, TL), lane-dense GELU
    h = jnp.dot(w2_ref[...], h.astype(cdt),
                preferred_element_type=jnp.float32) + b2_ref[...]
    h = gelu(h)

    # Layer 3: v = h^T @ W3 + b3 -> (TL, D), directly in natural output layout.
    v = jax.lax.dot_general(h.astype(cdt), w3_ref[...],
                            (((0,), (0,)), ((), ())),
                            preferred_element_type=jnp.float32) + b3_ref[...]
    o_ref[0] = v.astype(o_ref.dtype)


# ------------------------------------------------------------------
# Wrapper
# ------------------------------------------------------------------
def _round_up(x, m):
    return ((x + m - 1) // m) * m


def flow_matching_forward(z, t, params, *, tile_cols=1024,
                          compute_dtype=jnp.bfloat16, gelu="tanh",
                          out_dtype=None):
    """Forward pass of FlowMatchingNet.

    compute_dtype: MXU operand dtype (accumulation is always f32).
    gelu: "tanh" (fast, default) or "erf" (exact, matches torch GELU to ~1e-6).
    out_dtype: output dtype; pass jnp.bfloat16 to halve output HBM traffic
               if the consumer tolerates it (defaults to z.dtype).
    """
    B, L, D = z.shape
    H = params["w_t2"].shape[0]
    out_dtype = z.dtype if out_dtype is None else out_dtype
    gelu_fn = _GELUS[gelu]

    # ---- time MLP + fused (te @ W1t + b1): tiny [B,H] problem, plain JAX ----
    dot = functools.partial(jnp.dot, precision=_HIGHEST)
    tf = t.reshape(B, 1).astype(jnp.float32)
    te = dot(tf, params["w_t1"]) + params["b_t1"]
    te = dot(jax.nn.gelu(te, approximate=False), params["w_t2"]) + params["b_t2"]
    te1 = dot(te, params["w1t"]) + params["b1"]                 # (B, H)
    te1_3d = te1[:, :, None].astype(jnp.float32)                # (B, H, 1)

    # ---- tiling: z stays in natural (B, L, D) layout; pad L only if needed --
    tile_cols = max(128, _round_up(int(tile_cols), 128))
    L_pad = _round_up(L, 128)
    tile_cols = min(tile_cols, L_pad)
    L_pad = _round_up(L_pad, tile_cols)
    n_tiles = L_pad // tile_cols
    z_in = z if L_pad == L else jnp.pad(z, ((0, 0), (0, L_pad - L), (0, 0)))

    w1T = params["w1z"].T.astype(compute_dtype)                 # (H, D)
    w2T = params["w2"].T.astype(compute_dtype)                  # (H, H)
    w3 = params["w3"].astype(compute_dtype)                     # (H, D)
    b2T = params["b2"].reshape(H, 1).astype(jnp.float32)        # (H, 1)
    b3 = params["b3"].reshape(1, D).astype(jnp.float32)         # (1, D)

    # VMEM at TL=1024 is < 1 MiB incl. double buffering: far below the scoped
    # default on v5e/v6e and v7x (set vmem_limit_bytes only if TL/H/D grow a lot).
    v = pl.pallas_call(
        functools.partial(net_kernel, gelu=gelu_fn),
        out_shape=jax.ShapeDtypeStruct((B, L_pad, D), out_dtype),
        grid=(B, n_tiles),
        in_specs=[
            pl.BlockSpec((1, H, 1), lambda b, i: (b, 0, 0)),            # te1
            pl.BlockSpec((1, tile_cols, D), lambda b, i: (b, i, 0)),    # z tile
            pl.BlockSpec((H, D), lambda b, i: (0, 0)),                  # W1z^T
            pl.BlockSpec((H, H), lambda b, i: (0, 0)),                  # W2^T
            pl.BlockSpec((H, 1), lambda b, i: (0, 0)),                  # b2^T
            pl.BlockSpec((H, D), lambda b, i: (0, 0)),                  # W3
            pl.BlockSpec((1, D), lambda b, i: (0, 0)),                  # b3
        ],
        out_specs=pl.BlockSpec((1, tile_cols, D), lambda b, i: (b, i, 0)),
        compiler_params=pltpu.CompilerParams(
            dimension_semantics=("parallel", "parallel")),
    )(te1_3d, z_in, w1T, w2T, b2T, w3, b3)

    return v if L_pad == L else v[:, :L, :]


# ------------------------------------------------------------------
# Pure-JAX reference (f32, exact GELU) -- same math as the PyTorch module.
# ------------------------------------------------------------------
def reference_forward(z, t, params):
    B, L, D = z.shape
    H = params["w_t2"].shape[0]
    dot = functools.partial(jnp.dot, precision=_HIGHEST)
    gelu = lambda x: jax.nn.gelu(x, approximate=False)
    te = dot(t.reshape(B, 1), params["w_t1"]) + params["b_t1"]
    te = dot(gelu(te), params["w_t2"]) + params["b_t2"]
    te_flat = jnp.broadcast_to(te[:, None, :], (B, L, H)).reshape(B * L, H)
    z_flat = z.reshape(B * L, D)
    cat = jnp.concatenate([z_flat, te_flat], axis=1)
    w1 = jnp.concatenate([params["w1z"], params["w1t"]], axis=0)
    h = gelu(dot(cat, w1) + params["b1"])
    h = gelu(dot(h, params["w2"]) + params["b2"])
    v = dot(h, params["w3"]) + params["b3"]
    return v.reshape(B, L, D)


# ------------------------------------------------------------------
# Deterministic parameter init (weights stored transposed: [in, out])
# ------------------------------------------------------------------
def init_params(key, emb_dim, hidden_dim):
    ks = jax.random.split(key, 11)
    s = 0.2
    f32 = jnp.float32
    return {
        "w_t1": s * jax.random.normal(ks[0], (1, hidden_dim), f32),
        "b_t1": s * jax.random.normal(ks[1], (1, hidden_dim), f32),
        "w_t2": s * jax.random.normal(ks[2], (hidden_dim, hidden_dim), f32),
        "b_t2": s * jax.random.normal(ks[3], (1, hidden_dim), f32),
        "w1z":  s * jax.random.normal(ks[4], (emb_dim, hidden_dim), f32),
        "w1t":  s * jax.random.normal(ks[5], (hidden_dim, hidden_dim), f32),
        "b1":   s * jax.random.normal(ks[6], (1, hidden_dim), f32),
        "w2":   s * jax.random.normal(ks[7], (hidden_dim, hidden_dim), f32),
        "b2":   s * jax.random.normal(ks[8], (1, hidden_dim), f32),
        "w3":   s * jax.random.normal(ks[9], (hidden_dim, emb_dim), f32),
        "b3":   s * jax.random.normal(ks[10], (1, emb_dim), f32),
    }


# TODO(synk): ODESolver / sample_latents (iterative RK4 sampling driver) is a host-side
# loop around this forward pass and is intentionally not implemented as a kernel.

if __name__ == "__main__":
    B, L, D, H = 2, 8, 16, 32   # batch, seq len, emb_dim, hidden_dim

    key = jax.random.PRNGKey(0)
    kz, kt, kp = jax.random.split(key, 3)
    z = jax.random.normal(kz, (B, L, D), jnp.float32)
    t = jax.random.uniform(kt, (B,), jnp.float32)
    params = init_params(kp, D, H)

    v_ref = reference_forward(z, t, params)

    # Exact-precision run (f32 operands, exact erf GELU): tight check of the math.
    v_f32 = jax.block_until_ready(
        flow_matching_forward(z, t, params,
                              compute_dtype=jnp.float32, gelu="erf"))
    assert v_f32.shape == (B, L, D)
    err_f32 = float(jnp.max(jnp.abs(v_f32 - v_ref)))
    assert err_f32 < 2e-3, f"f32 kernel mismatch vs reference: {err_f32}"

    # Performance configuration (bf16 MXU operands, tanh GELU, f32 accumulation).
    v_fast = jax.block_until_ready(
        flow_matching_forward(z, t, params,
                              compute_dtype=jnp.bfloat16, gelu="tanh"))
    assert v_fast.shape == (B, L, D)
    err_fast = float(jnp.max(jnp.abs(v_fast - v_ref)))
    assert err_fast < 5e-2, f"fast kernel mismatch vs reference: {err_fast}"

    print("KERNEL_OK")
</pallas_src>

<mosaic_0001>
module attributes {stable_mosaic.version = 11 : i64} {
  func.func @net_kernel(%arg0: i32, %arg1: i32, %arg2: memref<1x32x1xf32, #tpu.memory_space<vmem>>, %arg3: memref<1x128x16xf32, #tpu.memory_space<vmem>>, %arg4: memref<32x16xf32, #tpu.memory_space<vmem>>, %arg5: memref<32x32xf32, #tpu.memory_space<vmem>>, %arg6: memref<32x1xf32, #tpu.memory_space<vmem>>, %arg7: memref<32x16xf32, #tpu.memory_space<vmem>>, %arg8: memref<1x16xf32, #tpu.memory_space<vmem>>, %arg9: memref<1x128x16xf32, #tpu.memory_space<vmem>>) attributes {dimension_semantics = [#tpu.dimension_semantics<parallel>, #tpu.dimension_semantics<parallel>], iteration_bounds = array<i64: 2, 1>, scalar_prefetch = 0 : i64, scratch_operands = 0 : i64, tpu.core_type = #tpu.core_type<tc>, window_params = [{transform_indices = @transform_0, window_bounds = array<i64: 1, 32, 1>}, {transform_indices = @transform_1, window_bounds = array<i64: 1, 128, 16>}, {pipeline_mode = #tpu.pipeline_mode<synchronous>, transform_indices = @transform_2, window_bounds = array<i64: 32, 16>}, {pipeline_mode = #tpu.pipeline_mode<synchronous>, transform_indices = @transform_3, window_bounds = array<i64: 32, 32>}, {pipeline_mode = #tpu.pipeline_mode<synchronous>, transform_indices = @transform_4, window_bounds = array<i64: 32, 1>}, {pipeline_mode = #tpu.pipeline_mode<synchronous>, transform_indices = @transform_5, window_bounds = array<i64: 32, 16>}, {pipeline_mode = #tpu.pipeline_mode<synchronous>, transform_indices = @transform_6, window_bounds = array<i64: 1, 16>}, {transform_indices = @transform_7, window_bounds = array<i64: 1, 128, 16>}]} {
    %c0 = arith.constant 0 : index
    %c0_0 = arith.constant 0 : index
    %c0_1 = arith.constant 0 : index
    %0 = vector.load %arg3[%c0, %c0_0, %c0_1] : memref<1x128x16xf32, #tpu.memory_space<vmem>>, vector<1x128x16xf32>
    %1 = vector.shape_cast %0 : vector<1x128x16xf32> to vector<128x16xf32>
    %c0_2 = arith.constant 0 : index
    %c0_3 = arith.constant 0 : index
    %c0_4 = arith.constant 0 : index
    %2 = vector.load %arg2[%c0_2, %c0_3, %c0_4] : memref<1x32x1xf32, #tpu.memory_space<vmem>>, vector<1x32x1xf32>
    %3 = vector.shape_cast %2 : vector<1x32x1xf32> to vector<32x1xf32>
    %c0_5 = arith.constant 0 : index
    %c0_6 = arith.constant 0 : index
    %4 = vector.load %arg4[%c0_5, %c0_6] : memref<32x16xf32, #tpu.memory_space<vmem>>, vector<32x16xf32>
    %cst = arith.constant dense<0.000000e+00> : vector<32x128xf32>
    %5 = tpu.matmul %4, %1, %cst {dimension_numbers = #tpu.dot_dimension_numbers<[1], [1], [0], [0], [0, 0, 1, 0], [], []>} : vector<32x16xf32>, vector<128x16xf32>, vector<32x128xf32> -> vector<32x128xf32>
    %6 = vector.broadcast %3 : vector<32x1xf32> to vector<32x128xf32>
    %7 = arith.addf %5, %6 : vector<32x128xf32>
    %cst_7 = arith.constant 5.000000e-01 : f32
    %8 = vector.broadcast %cst_7 : f32 to vector<32x128xf32>
    %9 = arith.mulf %8, %7 : vector<32x128xf32>
    %cst_8 = arith.constant 0.707106769 : f32
    %10 = vector.broadcast %cst_8 : f32 to vector<32x128xf32>
    %11 = arith.mulf %7, %10 : vector<32x128xf32>
    %cst_9 = arith.constant 0.000000e+00 : f32
    %12 = vector.broadcast %cst_9 : f32 to vector<32x128xf32>
    %13 = arith.cmpf oge, %11, %12 : vector<32x128xf32>
    %cst_10 = arith.constant 1.000000e+00 : f32
    %cst_11 = arith.constant -1.000000e+00 : f32
    %14 = vector.broadcast %cst_10 : f32 to vector<32x128xf32>
    %15 = vector.broadcast %cst_11 : f32 to vector<32x128xf32>
    %16 = arith.select %13, %14, %15 : vector<32x128xi1>, vector<32x128xf32>
    %17 = math.absf %11 : vector<32x128xf32>
    %cst_12 = arith.constant 0.327591091 : f32
    %18 = vector.broadcast %cst_12 : f32 to vector<32x128xf32>
    %19 = arith.mulf %18, %17 : vector<32x128xf32>
    %cst_13 = arith.constant 1.000000e+00 : f32
    %20 = vector.broadcast %cst_13 : f32 to vector<32x128xf32>
    %21 = arith.addf %20, %19 : vector<32x128xf32>
    %cst_14 = arith.constant 1.000000e+00 : f32
    %22 = vector.broadcast %cst_14 : f32 to vector<32x128xf32>
    %23 = arith.divf %22, %21 : vector<32x128xf32>
    %cst_15 = arith.constant 1.06140542 : f32
    %24 = vector.broadcast %cst_15 : f32 to vector<32x128xf32>
    %25 = arith.mulf %24, %23 : vector<32x128xf32>
    %cst_16 = arith.constant -1.45315206 : f32
    %26 = vector.broadcast %cst_16 : f32 to vector<32x128xf32>
    %27 = arith.addf %25, %26 : vector<32x128xf32>
    %28 = arith.mulf %27, %23 : vector<32x128xf32>
    %cst_17 = arith.constant 1.42141378 : f32
    %29 = vector.broadcast %cst_17 : f32 to vector<32x128xf32>
    %30 = arith.addf %28, %29 : vector<32x128xf32>
    %31 = arith.mulf %30, %23 : vector<32x128xf32>
    %cst_18 = arith.constant -0.284496725 : f32
    %32 = vector.broadcast %cst_18 : f32 to vector<32x128xf32>
    %33 = arith.addf %31, %32 : vector<32x128xf32>
    %34 = arith.mulf %33, %23 : vector<32x128xf32>
    %cst_19 = arith.constant 0.254829586 : f32
    %35 = vector.broadcast %cst_19 : f32 to vector<32x128xf32>
    %36 = arith.addf %34, %35 : vector<32x128xf32>
    %37 = arith.mulf %36, %23 : vector<32x128xf32>
    %cst_20 = arith.constant 0.000000e+00 : f32
    %38 = vector.broadcast %cst_20 : f32 to vector<32x128xf32>
    %39 = arith.subf %38, %17 : vector<32x128xf32>
    %40 = arith.mulf %39, %17 : vector<32x128xf32>
    %41 = math.exp %40 : vector<32x128xf32>
    %42 = arith.mulf %37, %41 : vector<32x128xf32>
    %cst_21 = arith.constant 1.000000e+00 : f32
    %43 = vector.broadcast %cst_21 : f32 to vector<32x128xf32>
    %44 = arith.subf %43, %42 : vector<32x128xf32>
    %45 = arith.mulf %16, %44 : vector<32x128xf32>
    %cst_22 = arith.constant 1.000000e+00 : f32
    %46 = vector.broadcast %cst_22 : f32 to vector<32x128xf32>
    %47 = arith.addf %46, %45 : vector<32x128xf32>
    %48 = arith.mulf %9, %47 : vector<32x128xf32>
    %c0_23 = arith.constant 0 : index
    %c0_24 = arith.constant 0 : index
    %49 = vector.load %arg5[%c0_23, %c0_24] : memref<32x32xf32, #tpu.memory_space<vmem>>, vector<32x32xf32>
    %cst_25 = arith.constant dense<0.000000e+00> : vector<32x128xf32>
    %50 = tpu.matmul %49, %48, %cst_25 {dimension_numbers = #tpu.dot_dimension_numbers<[1], [0], [0], [1], [0, 0, 1, 1], [], []>} : vector<32x32xf32>, vector<32x128xf32>, vector<32x128xf32> -> vector<32x128xf32>
    %c0_26 = arith.constant 0 : index
    %c0_27 = arith.constant 0 : index
    %51 = vector.load %arg6[%c0_26, %c0_27] : memref<32x1xf32, #tpu.memory_space<vmem>>, vector<32x1xf32>
    %52 = vector.broadcast %51 : vector<32x1xf32> to vector<32x128xf32>
    %53 = arith.addf %50, %52 : vector<32x128xf32>
    %cst_28 = arith.constant 5.000000e-01 : f32
    %54 = vector.broadcast %cst_28 : f32 to vector<32x128xf32>
    %55 = arith.mulf %54, %53 : vector<32x128xf32>
    %cst_29 = arith.constant 0.707106769 : f32
    %56 = vector.broadcast %cst_29 : f32 to vector<32x128xf32>
    %57 = arith.mulf %53, %56 : vector<32x128xf32>
    %cst_30 = arith.constant 0.000000e+00 : f32
    %58 = vector.broadcast %cst_30 : f32 to vector<32x128xf32>
    %59 = arith.cmpf oge, %57, %58 : vector<32x128xf32>
    %cst_31 = arith.constant 1.000000e+00 : f32
    %cst_32 = arith.constant -1.000000e+00 : f32
    %60 = vector.broadcast %cst_31 : f32 to vector<32x128xf32>
    %61 = vector.broadcast %cst_32 : f32 to vector<32x128xf32>
    %62 = arith.select %59, %60, %61 : vector<32x128xi1>, vector<32x128xf32>
    %63 = math.absf %57 : vector<32x128xf32>
    %cst_33 = arith.constant 0.327591091 : f32
    %64 = vector.broadcast %cst_33 : f32 to vector<32x128xf32>
    %65 = arith.mulf %64, %63 : vector<32x128xf32>
    %cst_34 = arith.constant 1.000000e+00 : f32
    %66 = vector.broadcast %cst_34 : f32 to vector<32x128xf32>
    %67 = arith.addf %66, %65 : vector<32x128xf32>
    %cst_35 = arith.constant 1.000000e+00 : f32
    %68 = vector.broadcast %cst_35 : f32 to vector<32x128xf32>
    %69 = arith.divf %68, %67 : vector<32x128xf32>
    %cst_36 = arith.constant 1.06140542 : f32
    %70 = vector.broadcast %cst_36 : f32 to vector<32x128xf32>
    %71 = arith.mulf %70, %69 : vector<32x128xf32>
    %cst_37 = arith.constant -1.45315206 : f32
    %72 = vector.broadcast %cst_37 : f32 to vector<32x128xf32>
    %73 = arith.addf %71, %72 : vector<32x128xf32>
    %74 = arith.mulf %73, %69 : vector<32x128xf32>
    %cst_38 = arith.constant 1.42141378 : f32
    %75 = vector.broadcast %cst_38 : f32 to vector<32x128xf32>
    %76 = arith.addf %74, %75 : vector<32x128xf32>
    %77 = arith.mulf %76, %69 : vector<32x128xf32>
    %cst_39 = arith.constant -0.284496725 : f32
    %78 = vector.broadcast %cst_39 : f32 to vector<32x128xf32>
    %79 = arith.addf %77, %78 : vector<32x128xf32>
    %80 = arith.mulf %79, %69 : vector<32x128xf32>
    %cst_40 = arith.constant 0.254829586 : f32
    %81 = vector.broadcast %cst_40 : f32 to vector<32x128xf32>
    %82 = arith.addf %80, %81 : vector<32x128xf32>
    %83 = arith.mulf %82, %69 : vector<32x128xf32>
    %cst_41 = arith.constant 0.000000e+00 : f32
    %84 = vector.broadcast %cst_41 : f32 to vector<32x128xf32>
    %85 = arith.subf %84, %63 : vector<32x128xf32>
    %86 = arith.mulf %85, %63 : vector<32x128xf32>
    %87 = math.exp %86 : vector<32x128xf32>
    %88 = arith.mulf %83, %87 : vector<32x128xf32>
    %cst_42 = arith.constant 1.000000e+00 : f32
    %89 = vector.broadcast %cst_42 : f32 to vector<32x128xf32>
    %90 = arith.subf %89, %88 : vector<32x128xf32>
    %91 = arith.mulf %62, %90 : vector<32x128xf32>
    %cst_43 = arith.constant 1.000000e+00 : f32
    %92 = vector.broadcast %cst_43 : f32 to vector<32x128xf32>
    %93 = arith.addf %92, %91 : vector<32x128xf32>
    %94 = arith.mulf %55, %93 : vector<32x128xf32>
    %c0_44 = arith.constant 0 : index
    %c0_45 = arith.constant 0 : index
    %95 = vector.load %arg7[%c0_44, %c0_45] : memref<32x16xf32, #tpu.memory_space<vmem>>, vector<32x16xf32>
    %cst_46 = arith.constant dense<0.000000e+00> : vector<128x16xf32>
    %96 = tpu.matmul %94, %95, %cst_46 {dimension_numbers = #tpu.dot_dimension_numbers<[0], [0], [1], [1], [0, 1, 1, 1], [], []>} : vector<32x128xf32>, vector<32x16xf32>, vector<128x16xf32> -> vector<128x16xf32>
    %c0_47 = arith.constant 0 : index
    %c0_48 = arith.constant 0 : index
    %97 = vector.load %arg8[%c0_47, %c0_48] : memref<1x16xf32, #tpu.memory_space<vmem>>, vector<1x16xf32>
    %98 = vector.broadcast %97 : vector<1x16xf32> to vector<128x16xf32>
    %99 = arith.addf %96, %98 : vector<128x16xf32>
    %c0_49 = arith.constant 0 : index
    %c0_50 = arith.constant 0 : index
    %c0_51 = arith.constant 0 : index
    %100 = vector.load %arg9[%c0_49, %c0_50, %c0_51] : memref<1x128x16xf32, #tpu.memory_space<vmem>>, vector<1x128x16xf32>
    %101 = vector.shape_cast %100 : vector<1x128x16xf32> to vector<128x16xf32>
    %102 = vector.shape_cast %99 : vector<128x16xf32> to vector<1x128x16xf32>
    tpu.vector_store %arg9[%c0_49, %c0_50, %c0_51], %102 {strides = array<i32>} : memref<1x128x16xf32, #tpu.memory_space<vmem>>, vector<1x128x16xf32>,
    return
  }
  func.func @transform_0(%arg0: i32, %arg1: i32) -> (i32, i32, i32) {
    %c0_i32 = arith.constant 0 : i32
    %c0_i32_0 = arith.constant 0 : i32
    %c0_i32_1 = arith.constant 0 : i32
    return %arg0, %c0_i32, %c0_i32_0 : i32, i32, i32
  }
  func.func @transform_1(%arg0: i32, %arg1: i32) -> (i32, i32, i32) {
    %c0_i32 = arith.constant 0 : i32
    %c0_i32_0 = arith.constant 0 : i32
    return %arg0, %arg1, %c0_i32 : i32, i32, i32
  }
  func.func @transform_2(%arg0: i32, %arg1: i32) -> (i32, i32) {
    %c0_i32 = arith.constant 0 : i32
    %c0_i32_0 = arith.constant 0 : i32
    %c0_i32_1 = arith.constant 0 : i32
    return %c0_i32, %c0_i32_0 : i32, i32
  }
  func.func @transform_3(%arg0: i32, %arg1: i32) -> (i32, i32) {
    %c0_i32 = arith.constant 0 : i32
    %c0_i32_0 = arith.constant 0 : i32
    %c0_i32_1 = arith.constant 0 : i32
    return %c0_i32, %c0_i32_0 : i32, i32
  }
  func.func @transform_4(%arg0: i32, %arg1: i32) -> (i32, i32) {
    %c0_i32 = arith.constant 0 : i32
    %c0_i32_0 = arith.constant 0 : i32
    %c0_i32_1 = arith.constant 0 : i32
    return %c0_i32, %c0_i32_0 : i32, i32
  }
  func.func @transform_5(%arg0: i32, %arg1: i32) -> (i32, i32) {
    %c0_i32 = arith.constant 0 : i32
    %c0_i32_0 = arith.constant 0 : i32
    %c0_i32_1 = arith.constant 0 : i32
    return %c0_i32, %c0_i32_0 : i32, i32
  }
  func.func @transform_6(%arg0: i32, %arg1: i32) -> (i32, i32) {
    %c0_i32 = arith.constant 0 : i32
    %c0_i32_0 = arith.constant 0 : i32
    %c0_i32_1 = arith.constant 0 : i32
    return %c0_i32, %c0_i32_0 : i32, i32
  }
  func.func @transform_7(%arg0: i32, %arg1: i32) -> (i32, i32, i32) {
    %c0_i32 = arith.constant 0 : i32
    %c0_i32_0 = arith.constant 0 : i32
    return %arg0, %arg1, %c0_i32 : i32, i32, i32
  }
}

</mosaic_0001>

<llo_original>
// kernel: tpu_custom_call.1
$region0: #{tpu_custom_call.1}
  #allocation0 [shape = 'u32[]', space=smem, size = 0x4, offset = 0x4, fixed_abs, tag = 'smem constant byte address 0x4 - core index']
  #allocation1 [shape = 'u32[144,128]{1,0:T(1,128)}', space=vmem, size = 0x12000, scoped, tag = 'internal scratch']
  %s0 = inlined_call_operand.vmem [shape: f32[2,32,1], index: 0, kind: input, shape index: {}]
  %s1 = inlined_call_operand.vmem [shape: f32[2,128,16], index: 1, kind: input, shape index: {}]
  %s2 = inlined_call_operand.vmem [shape: f32[32,16], index: 2, kind: input, shape index: {}]
  %s3 = inlined_call_operand.vmem [shape: f32[32,32], index: 3, kind: input, shape index: {}]
  %s4 = inlined_call_operand.vmem [shape: f32[32,1], index: 4, kind: input, shape index: {}]
  %s5 = inlined_call_operand.vmem [shape: f32[32,16], index: 5, kind: input, shape index: {}]
  %s6 = inlined_call_operand.vmem [shape: f32[1,16], index: 6, kind: input, shape index: {}]
  %s7 = inlined_call_operand.vmem [shape: f32[2,128,16], index: 7, kind: output, shape index: {}]
  %s8 = sld [smem:[#allocation0]]
  $region61: #{tpu_custom_call.1} parent=0
    _
  %s10 = ssub.s32 1, %s8
  %s11 = scalar_select 0, %s10, %s8
  loop: start=0, step=1, limit=4
  $region2: #{tpu_custom_call.1} parent=0 // loop_pre_header
    _
  $region3: #{tpu_custom_call.1} parent=0 // loop_header
    %s13 = sphi 0, %s17
    %p14 = scmp.ge.s32.totalorder %s13, 4
    %s20 = sphi 0, %s32
    %s21 = sphi 0, %s28
    %s22 = sphi 0, %s20
    %s23 = sphi 0, %s21
    %s24 = sphi 0, %s22
    %s25 = sphi 0, %s23
    %s35 = sphi 0, %s37
    %s38 = sphi 0, %s35
    %s39 = sphi 0, %s38
    %s55 = sphi 0, %s39
    %s63 = sphi 0, %s65
    %s66 = sphi 0, %s63
    %s67 = sphi 0, %s66
    %s83 = sphi 0, %s67
    %s87 = sphi 0, %s87
    %s89 = sphi 0, %s87
    %s90 = sphi 0, %s89
    %s104 = sphi 0, %s90
    %s108 = sphi 0, %s108
    %s110 = sphi 0, %s108
    %s111 = sphi 0, %s110
    %s125 = sphi 0, %s111
    %s129 = sphi 0, %s129
    %s131 = sphi 0, %s129
    %s132 = sphi 0, %s131
    %s146 = sphi 0, %s132
    %s150 = sphi 0, %s150
    %s152 = sphi 0, %s150
    %s153 = sphi 0, %s152
    %s167 = sphi 0, %s153
    %s171 = sphi 0, %s171
    %s173 = sphi 0, %s171
    %s174 = sphi 0, %s173
    %s188 = sphi 0, %s174
    %s196 = sphi 0, %s198
    %s199 = sphi 0, %s196
    %s200 = sphi 0, %s199
    %s216 = sphi 0, %s200
  $region4: #{tpu_custom_call.1} parent=0 // loop_header_branch
    %16 = sbr.rel (%p14) target = $region8
  $region5: #{tpu_custom_call.1} parent=0 // loop_body
    %s18 = ssub.s32 %s13, 1
    %s19 = ssub.s32 %s13, 2
    %s26 = sadd.s32 1, %s21
    %p27 = scmp.ge.s32.totalorder %s26, 1
    %s28 = scalar_select %p27, 0, %s26
    %s29 = sadd.s32 1, %s20
    %s30 = scalar_select %p27, %s29, %s20
    %p31 = scmp.ge.s32.totalorder %s30, 2
    %s32 = scalar_select %p31, 0, %s30
    %s33 = ssub.s32 %s20, %s32
    %p34 = scmp.eq.s32.totalorder %s33, 0
    %s36 = sadd.s32 %s35, 1
    %s37 = scalar_select %p34, %s35, %s36
    %p40 = pneg %p34
    %p41 = scmp.eq.s32.totalorder %s13, 1
    %p42 = por %p40, %p41
    %p43 = scmp.ne.s32.totalorder %s35, %s38
    %p44 = scmp.eq.s32.totalorder %s13, 0
    %p45 = por %p43, %p44
    %p46 = scmp.ne.s32.totalorder %s35, %s38
    %p47 = scmp.eq.s32.totalorder %s18, 1
    %p48 = por %p46, %p47
    %p49 = scmp.ne.s32.totalorder %s38, %s39
    %p50 = scmp.eq.s32.totalorder %s18, 0
    %p51 = por %p49, %p50
    %p52 = scmp.ne.s32.totalorder %s38, %s39
    %p53 = scmp.eq.s32.totalorder %s19, 1
    %p54 = por %p52, %p53
    %p56 = scmp.ne.s32.totalorder %s39, %s55
    %p57 = scmp.eq.s32.totalorder %s19, 0
    %p58 = por %p56, %p57
    %s59 = ssub.s32 %s20, %s32
    %s60 = ssub.s32 %s21, %s28
    %s61 = sor.u32 %s59, %s60
    %p62 = scmp.eq.s32.totalorder %s61, 0
    %s64 = sadd.s32 %s63, 1
    %s65 = scalar_select %p62, %s63, %s64
    %p68 = pneg %p62
    %p69 = scmp.eq.s32.totalorder %s13, 1
    %p70 = por %p68, %p69
    %p71 = scmp.ne.s32.totalorder %s63, %s66
    %p72 = scmp.eq.s32.totalorder %s13, 0
    %p73 = por %p71, %p72
    %p74 = scmp.ne.s32.totalorder %s63, %s66
    %p75 = scmp.eq.s32.totalorder %s18, 1
    %p76 = por %p74, %p75
    %p77 = scmp.ne.s32.totalorder %s66, %s67
    %p78 = scmp.eq.s32.totalorder %s18, 0
    %p79 = por %p77, %p78
    %p80 = scmp.ne.s32.totalorder %s66, %s67
    %p81 = scmp.eq.s32.totalorder %s19, 1
    %p82 = por %p80, %p81
    %p84 = scmp.ne.s32.totalorder %s67, %s83
    %p85 = scmp.eq.s32.totalorder %s19, 0
    %p86 = por %p84, %p85
    %s88 = sadd.s32 %s87, 1
    %p91 = scmp.eq.s32.totalorder %s13, 1
    %p92 = scmp.ne.s32.totalorder %s87, %s89
    %p93 = scmp.eq.s32.totalorder %s13, 0
    %p94 = por %p92, %p93
    %p95 = scmp.ne.s32.totalorder %s87, %s89
    %p96 = scmp.eq.s32.totalorder %s18, 1
    %p97 = por %p95, %p96
    %p98 = scmp.ne.s32.totalorder %s89, %s90
    %p99 = scmp.eq.s32.totalorder %s18, 0
    %p100 = por %p98, %p99
    %p101 = scmp.ne.s32.totalorder %s89, %s90
    %p102 = scmp.eq.s32.totalorder %s19, 1
    %p103 = por %p101, %p102
    %p105 = scmp.ne.s32.totalorder %s90, %s104
    %p106 = scmp.eq.s32.totalorder %s19, 0
    %p107 = por %p105, %p106
    %s109 = sadd.s32 %s108, 1
    %p112 = scmp.eq.s32.totalorder %s13, 1
    %p113 = scmp.ne.s32.totalorder %s108, %s110
    %p114 = scmp.eq.s32.totalorder %s13, 0
    %p115 = por %p113, %p114
    %p116 = scmp.ne.s32.totalorder %s108, %s110
    %p117 = scmp.eq.s32.totalorder %s18, 1
    %p118 = por %p116, %p117
    %p119 = scmp.ne.s32.totalorder %s110, %s111
    %p120 = scmp.eq.s32.totalorder %s18, 0
    %p121 = por %p119, %p120
    %p122 = scmp.ne.s32.totalorder %s110, %s111
    %p123 = scmp.eq.s32.totalorder %s19, 1
    %p124 = por %p122, %p123
    %p126 = scmp.ne.s32.totalorder %s111, %s125
    %p127 = scmp.eq.s32.totalorder %s19, 0
    %p128 = por %p126, %p127
    %s130 = sadd.s32 %s129, 1
    %p133 = scmp.eq.s32.totalorder %s13, 1
    %p134 = scmp.ne.s32.totalorder %s129, %s131
    %p135 = scmp.eq.s32.totalorder %s13, 0
    %p136 = por %p134, %p135
    %p137 = scmp.ne.s32.totalorder %s129, %s131
    %p138 = scmp.eq.s32.totalorder %s18, 1
    %p139 = por %p137, %p138
    %p140 = scmp.ne.s32.totalorder %s131, %s132
    %p141 = scmp.eq.s32.totalorder %s18, 0
    %p142 = por %p140, %p141
    %p143 = scmp.ne.s32.totalorder %s131, %s132
    %p144 = scmp.eq.s32.totalorder %s19, 1
    %p145 = por %p143, %p144
    %p147 = scmp.ne.s32.totalorder %s132, %s146
    %p148 = scmp.eq.s32.totalorder %s19, 0
    %p149 = por %p147, %p148
    %s151 = sadd.s32 %s150, 1
    %p154 = scmp.eq.s32.totalorder %s13, 1
    %p155 = scmp.ne.s32.totalorder %s150, %s152
    %p156 = scmp.eq.s32.totalorder %s13, 0
    %p157 = por %p155, %p156
    %p158 = scmp.ne.s32.totalorder %s150, %s152
    %p159 = scmp.eq.s32.totalorder %s18, 1
    %p160 = por %p158, %p159
    %p161 = scmp.ne.s32.totalorder %s152, %s153
    %p162 = scmp.eq.s32.totalorder %s18, 0
    %p163 = por %p161, %p162
    %p164 = scmp.ne.s32.totalorder %s152, %s153
    %p165 = scmp.eq.s32.totalorder %s19, 1
    %p166 = por %p164, %p165
    %p168 = scmp.ne.s32.totalorder %s153, %s167
    %p169 = scmp.eq.s32.totalorder %s19, 0
    %p170 = por %p168, %p169
    %s172 = sadd.s32 %s171, 1
    %p175 = scmp.eq.s32.totalorder %s13, 1
    %p176 = scmp.ne.s32.totalorder %s171, %s173
    %p177 = scmp.eq.s32.totalorder %s13, 0
    %p178 = por %p176, %p177
    %p179 = scmp.ne.s32.totalorder %s171, %s173
    %p180 = scmp.eq.s32.totalorder %s18, 1
    %p181 = por %p179, %p180
    %p182 = scmp.ne.s32.totalorder %s173, %s174
    %p183 = scmp.eq.s32.totalorder %s18, 0
    %p184 = por %p182, %p183
    %p185 = scmp.ne.s32.totalorder %s173, %s174
    %p186 = scmp.eq.s32.totalorder %s19, 1
    %p187 = por %p185, %p186
    %p189 = scmp.ne.s32.totalorder %s174, %s188
    %p190 = scmp.eq.s32.totalorder %s19, 0
    %p191 = por %p189, %p190
    %s192 = ssub.s32 %s20, %s32
    %s193 = ssub.s32 %s21, %s28
    %s194 = sor.u32 %s192, %s193
    %p195 = scmp.eq.s32.totalorder %s194, 0
    %s197 = sadd.s32 %s196, 1
    %s198 = scalar_select %p195, %s196, %s197
    %p201 = pneg %p195
    %p202 = scmp.eq.s32.totalorder %s13, 1
    %p203 = por %p201, %p202
    %p204 = scmp.ne.s32.totalorder %s196, %s199
    %p205 = scmp.eq.s32.totalorder %s13, 0
    %p206 = por %p204, %p205
    %p207 = scmp.ne.s32.totalorder %s196, %s199
    %p208 = scmp.eq.s32.totalorder %s18, 1
    %p209 = por %p207, %p208
    %p210 = scmp.ne.s32.totalorder %s199, %s200
    %p211 = scmp.eq.s32.totalorder %s18, 0
    %p212 = por %p210, %p211
    %p213 = scmp.ne.s32.totalorder %s199, %s200
    %p214 = scmp.eq.s32.totalorder %s19, 1
    %p215 = por %p213, %p214
    %p217 = scmp.ne.s32.totalorder %s200, %s216
    %p218 = scmp.eq.s32.totalorder %s19, 0
    %p219 = por %p217, %p218
    %p220 = scmp.le.s32.totalorder 1, %s13
    %p221 = scmp.lt.s32.totalorder %s13, 3
    %p222 = pnand %p220, %p221
    %p223 = pneg %p222
    // Predicated region
    $region9: #{tpu_custom_call.1} parent=5 // pred_check
      _
    $region10: #{tpu_custom_call.1} parent=5 // pred_check_branch
      %225 = sbr.rel (%p222) target = $region12
    $region11: #{tpu_custom_call.1} parent=5 // pred_region
      %s226 = ssub.s32 %s13, 1
      // Predicated region
      $region13: #{tpu_custom_call.1} parent=11 // pred_check
        %p227 = pneg %p100
      $region14: #{tpu_custom_call.1} parent=11 // pred_check_branch
        %229 = sbr.rel (%p227) target = $region16
      $region15: #{tpu_custom_call.1} parent=11 // pred_region
        _
      $region16: #{tpu_custom_call.1} parent=11 // pred_fallthru
        _
      // Predicated region
      $region17: #{tpu_custom_call.1} parent=11 // pred_check
        %p230 = pneg %p121
      $region18: #{tpu_custom_call.1} parent=11 // pred_check_branch
        %232 = sbr.rel (%p230) target = $region20
      $region19: #{tpu_custom_call.1} parent=11 // pred_region
        _
      $region20: #{tpu_custom_call.1} parent=11 // pred_fallthru
        _
      // Predicated region
      $region21: #{tpu_custom_call.1} parent=11 // pred_check
        %p233 = pneg %p142
      $region22: #{tpu_custom_call.1} parent=11 // pred_check_branch
        %235 = sbr.rel (%p233) target = $region24
      $region23: #{tpu_custom_call.1} parent=11 // pred_region
        _
      $region24: #{tpu_custom_call.1} parent=11 // pred_fallthru
        _
      // Predicated region
      $region25: #{tpu_custom_call.1} parent=11 // pred_check
        %p236 = pneg %p163
      $region26: #{tpu_custom_call.1} parent=11 // pred_check_branch
        %238 = sbr.rel (%p236) target = $region28
      $region27: #{tpu_custom_call.1} parent=11 // pred_region
        _
      $region28: #{tpu_custom_call.1} parent=11 // pred_fallthru
        _
      // Predicated region
      $region29: #{tpu_custom_call.1} parent=11 // pred_check
        %p239 = pneg %p184
      $region30: #{tpu_custom_call.1} parent=11 // pred_check_branch
        %241 = sbr.rel (%p239) target = $region32
      $region31: #{tpu_custom_call.1} parent=11 // pred_region
        _
      $region32: #{tpu_custom_call.1} parent=11 // pred_fallthru
        _
    $region12: #{tpu_custom_call.1} parent=5 // pred_fallthru
      _
    %p242 = scmp.lt.s32.totalorder %s13, 2
    // Predicated region
    $region33: #{tpu_custom_call.1} parent=5 // pred_check
      %p243 = pneg %p242
    $region34: #{tpu_custom_call.1} parent=5 // pred_check_branch
      %245 = sbr.rel (%p243) target = $region36
    $region35: #{tpu_custom_call.1} parent=5 // pred_region
      // Predicated region
      $region37: #{tpu_custom_call.1} parent=35 // pred_check
        %p246 = pneg %p45
      $region38: #{tpu_custom_call.1} parent=35 // pred_check_branch
        %248 = sbr.rel (%p246) target = $region40
      $region39: #{tpu_custom_call.1} parent=35 // pred_region
        %p249 = scmp.lt.s32.totalorder %s20, 1
        %s250 = scalar_select %p249, %s20, 1
        %s251 = smul.addr %s250, 4
        %s252 = smul.addr %s251, 8
        %s253 = scalar_lea.vmem %s0, %s252
      $region40: #{tpu_custom_call.1} parent=35 // pred_fallthru
        _
      // Predicated region
      $region41: #{tpu_custom_call.1} parent=35 // pred_check
        %p254 = pneg %p73
      $region42: #{tpu_custom_call.1} parent=35 // pred_check_branch
        %256 = sbr.rel (%p254) target = $region44
      $region43: #{tpu_custom_call.1} parent=35 // pred_region
        %s257 = smul.u32 16, %s21
        %p258 = scmp.lt.s32.totalorder %s20, 1
        %s259 = scalar_select %p258, %s20, 1
        %p260 = scmp.lt.s32.totalorder %s257, 15
        %s261 = scalar_select %p260, %s257, 15
        %s262 = smul.addr %s259, 16
        %s263 = sadd.s32 %s261, %s262
        %s264 = smul.addr %s263, 8
        %s265 = scalar_lea.vmem %s1, %s264
        %s266 = smul.u32 16, %s21
      $region44: #{tpu_custom_call.1} parent=35 // pred_fallthru
        _
    $region36: #{tpu_custom_call.1} parent=5 // pred_fallthru
      _
    %p267 = scmp.le.s32.totalorder 1, %s13
    %p268 = scmp.lt.s32.totalorder %s13, 3
    %p269 = pnand %p267, %p268
    %p270 = pneg %p269
    // Predicated region
    $region45: #{tpu_custom_call.1} parent=5 // pred_check
      _
    $region46: #{tpu_custom_call.1} parent=5 // pred_check_branch
      %272 = sbr.rel (%p269) target = $region48
    $region47: #{tpu_custom_call.1} parent=5 // pred_region
      %s273 = ssub.s32 %s13, 1
      %p274 = scmp.lt.s32.totalorder %s22, 1
      %s275 = scalar_select %p274, %s22, 1
      %s276 = smul.addr %s275, 4
      %s277 = smul.addr %s276, 8
      %s278 = scalar_lea.vmem %s0, %s277
      %p279 = pneg %p51
      %p280 = pneg %p48
      %s281 = smul.u32 16, %s23
      %p282 = scmp.lt.s32.totalorder %s22, 1
      %s283 = scalar_select %p282, %s22, 1
      %p284 = scmp.lt.s32.totalorder %s281, 15
      %s285 = scalar_select %p284, %s281, 15
      %s286 = smul.addr %s283, 16
      %s287 = sadd.s32 %s285, %s286
      %s288 = smul.addr %s287, 8
      %s289 = scalar_lea.vmem %s1, %s288
      %p290 = pneg %p79
      %p291 = pneg %p76
      %p292 = pneg %p100
      %p293 = pneg %p97
      %p294 = pneg %p121
      %p295 = pneg %p118
      %p296 = pneg %p142
      %p297 = pneg %p139
      %p298 = pneg %p163
      %p299 = pneg %p160
      %p300 = pneg %p184
      %p301 = pneg %p181
      %p302 = pneg %p212
      %p303 = pneg %p209
      %s304 = smul.u32 16, %s23
      %p305 = scmp.lt.s32.totalorder %s22, 1
      %s306 = scalar_select %p305, %s22, 1
      %p307 = scmp.lt.s32.totalorder %s304, 15
      %s308 = scalar_select %p307, %s304, 15
      %s309 = smul.addr %s306, 16
      %s310 = sadd.s32 %s308, %s309
      %s311 = smul.addr %s310, 8
      %s312 = scalar_lea.vmem %s7, %s311
      %p313 = scmp.lt.s32.totalorder %s22, 1
      %s314 = scalar_select %p313, %s22, 1
      %s315 = smul.addr %s314, 4
      %s316 = smul.addr %s315, 8
      %s317 = scalar_lea.vmem %s0, %s316
      %s318 = smul.u32 16, %s23
      %p319 = scmp.lt.s32.totalorder %s22, 1
      %s320 = scalar_select %p319, %s22, 1
      %p321 = scmp.lt.s32.totalorder %s318, 15
      %s322 = scalar_select %p321, %s318, 15
      %s323 = smul.addr %s320, 16
      %s324 = sadd.s32 %s322, %s323
      %s325 = smul.addr %s324, 8
      %s326 = scalar_lea.vmem %s1, %s325
      %s327 = smul.u32 16, %s23
      %s328 = smul.u32 16, %s23
      %p329 = scmp.lt.s32.totalorder %s22, 1
      %s330 = scalar_select %p329, %s22, 1
      %p331 = scmp.lt.s32.totalorder %s328, 15
      %s332 = scalar_select %p331, %s328, 15
      %s333 = smul.addr %s330, 16
      %s334 = sadd.s32 %s332, %s333
      %s335 = smul.addr %s334, 8
      %s336 = scalar_lea.vmem %s7, %s335
      %s337 = smul.u32 16, %s23
      %v338 = vld [vmem:[%s326] sm:$0xff]
      %v339 = vld [vmem:[%s326 + $0x8] sm:$0xff]
      %v340 = vld [vmem:[%s326 + $0x10] sm:$0xff]
      %v341 = vld [vmem:[%s326 + $0x18] sm:$0xff]
      %v342 = vld [vmem:[%s326 + $0x20] sm:$0xff]
      %v343 = vld [vmem:[%s326 + $0x28] sm:$0xff]
      %v344 = vld [vmem:[%s326 + $0x30] sm:$0xff]
      %v345 = vld [vmem:[%s326 + $0x38] sm:$0xff]
      %v346 = vld [vmem:[%s326 + $0x40] sm:$0xff]
      %v347 = vld [vmem:[%s326 + $0x48] sm:$0xff]
      %v348 = vld [vmem:[%s326 + $0x50] sm:$0xff]
      %v349 = vld [vmem:[%s326 + $0x58] sm:$0xff]
      %v350 = vld [vmem:[%s326 + $0x60] sm:$0xff]
      %v351 = vld [vmem:[%s326 + $0x68] sm:$0xff]
      %v352 = vld [vmem:[%s326 + $0x70] sm:$0xff]
      %v353 = vld [vmem:[%s326 + $0x78] sm:$0xff]
      %v354 = vld [vmem:[%s317] sm:$0xff]
      %v355 = vld [vmem:[%s317 + $0x8] sm:$0xff]
      %v356 = vld [vmem:[%s317 + $0x10] sm:$0xff]
      %v357 = vld [vmem:[%s317 + $0x18] sm:$0xff]
      %v358 = vld [vmem:[%s2] sm:$0xff]
      %v359 = vld [vmem:[%s2 + $0x8] sm:$0xff]
      %v360 = vld [vmem:[%s2 + $0x10] sm:$0xff]
      %v361 = vld [vmem:[%s2 + $0x18] sm:$0xff]
      %363 = vset.pattern.permute.xlu0 0
      %364 = vperm.xlu0 %363, %v354
      %v365 = vpop.permute.xlu0 %364
      %368 = vset.pattern.permute.xlu0 0
      %369 = vperm.xlu0 %368, %v355
      %v370 = vpop.permute.xlu0 %369
      %373 = vset.pattern.permute.xlu0 0
      %374 = vperm.xlu0 %373, %v356
      %v375 = vpop.permute.xlu0 %374
      %378 = vset.pattern.permute.xlu0 0
      %379 = vperm.xlu0 %378, %v357
      %v380 = vpop.permute.xlu0 %379
      %vm382 = vcmask 130048
      %v384 = vsel %vm382, %v358, 0
      %v387 = vsel %vm382, %v359, 0
      %v390 = vsel %vm382, %v360, 0
      %v393 = vsel %vm382, %v361, 0
      %v396 = vsel %vm382, %v338, 0
      %v399 = vsel %vm382, %v339, 0
      %v402 = vsel %vm382, %v340, 0
      %v405 = vsel %vm382, %v341, 0
      %v408 = vsel %vm382, %v342, 0
      %v411 = vsel %vm382, %v343, 0
      %v414 = vsel %vm382, %v344, 0
      %v417 = vsel %vm382, %v345, 0
      %v420 = vsel %vm382, %v346, 0
      %v423 = vsel %vm382, %v347, 0
      %v426 = vsel %vm382, %v348, 0
      %v429 = vsel %vm382, %v349, 0
      %v432 = vsel %vm382, %v350, 0
      %v435 = vsel %vm382, %v351, 0
      %v438 = vsel %vm382, %v352, 0
      %v441 = vsel %vm382, %v353, 0
      %443 = vmatprep.subr.mxu0 0.0
      %444 = vmatpush1.xpose.msra.mxu0 %v441
      %445 = vmatprep.subr.mxu0 0.0
      %446 = vmatpush1.xpose.msra.mxu0 %v438
      %447 = vmatprep.subr.mxu0 0.0
      %448 = vmatpush1.xpose.msra.mxu0 %v435
      %449 = vmatprep.subr.mxu0 0.0
      %450 = vmatpush1.xpose.msra.mxu0 %v432
      %451 = vmatprep.subr.mxu0 0.0
      %452 = vmatpush1.xpose.msra.mxu0 %v429
      %453 = vmatprep.subr.mxu0 0.0
      %454 = vmatpush1.xpose.msra.mxu0 %v426
      %455 = vmatprep.subr.mxu0 0.0
      %456 = vmatpush1.xpose.msra.mxu0 %v423
      %457 = vmatprep.subr.mxu0 0.0
      %458 = vmatpush1.xpose.msra.mxu0 %v420
      %459 = vmatprep.subr.mxu0 0.0
      %460 = vmatpush1.xpose.msra.mxu0 %v417
      %461 = vmatprep.subr.mxu0 0.0
      %462 = vmatpush1.xpose.msra.mxu0 %v414
      %463 = vmatprep.subr.mxu0 0.0
      %464 = vmatpush1.xpose.msra.mxu0 %v411
      %465 = vmatprep.subr.mxu0 0.0
      %466 = vmatpush1.xpose.msra.mxu0 %v408
      %467 = vmatprep.subr.mxu0 0.0
      %468 = vmatpush1.xpose.msra.mxu0 %v405
      %469 = vmatprep.subr.mxu0 0.0
      %470 = vmatpush1.xpose.msra.mxu0 %v402
      %471 = vmatprep.subr.mxu0 0.0
      %472 = vmatpush1.xpose.msra.mxu0 %v399
      %473 = vmatprep.subr.mxu0 0.0
      %474 = vmatpush1.xpose.msra.mxu0 %v396
      %475 = vmatprep.subr.mxu0 0.0
      %476 = vmatpush2.xpose.msra.mxu0 0.0
      %477 = vmatprep.subr.mxu0 0.0
      %478 = vmatpush2.xpose.msra.mxu0 0.0
      %479 = vmatprep.subr.mxu0 0.0
      %480 = vmatpush2.xpose.msra.mxu0 0.0
      %481 = vmatprep.subr.mxu0 0.0
      %482 = vmatpush2.xpose.msra.mxu0 0.0
      %483 = vmatprep.subr.mxu0 0.0
      %484 = vmatpush2.xpose.msra.mxu0 0.0
      %485 = vmatprep.subr.mxu0 0.0
      %486 = vmatpush2.xpose.msra.mxu0 0.0
      %487 = vmatprep.subr.mxu0 0.0
      %488 = vmatpush2.xpose.msra.mxu0 0.0
      %489 = vmatprep.subr.mxu0 0.0
      %490 = vmatpush2.xpose.msra.mxu0 0.0
      %491 = vmatprep.subr.mxu0 0.0
      %492 = vmatpush2.xpose.msra.mxu0 0.0
      %493 = vmatprep.subr.mxu0 0.0
      %494 = vmatpush2.xpose.msra.mxu0 0.0
      %495 = vmatprep.subr.mxu0 0.0
      %496 = vmatpush2.xpose.msra.mxu0 0.0
      %497 = vmatprep.subr.mxu0 0.0
      %498 = vmatpush2.xpose.msra.mxu0 0.0
      %499 = vmatprep.subr.mxu0 0.0
      %500 = vmatpush2.xpose.msra.mxu0 0.0
      %501 = vmatprep.subr.mxu0 0.0
      %502 = vmatpush2.xpose.msra.mxu0 0.0
      %503 = vmatprep.subr.mxu0 0.0
      %504 = vmatpush2.xpose.msra.mxu0 0.0
      %505 = vmatprep.subr.mxu0 0.0
      %506 = vmatpush2.xpose.msra.mxu0 0.0
      %507 = vmatprep.mubr.f32.mxu0 0.0
      %508 = vmatmul.mubr.f32.gmra.mxu0 %v384
      %v509 = vpop.f32.mrf.mxu0
      %v510 = vadd.f32 %v365, %v509
      %v511 = vpop.f32.mrf.mxu0
      %512 = vmatprep.mubr.f32.mxu0 0.0
      %513 = vmatmul.mubr.f32.gmra.mxu0 %v387
      %v514 = vpop.f32.mrf.mxu0
      %v515 = vadd.f32 %v370, %v514
      %v516 = vpop.f32.mrf.mxu0
      %517 = vmatprep.mubr.f32.mxu0 0.0
      %518 = vmatmul.mubr.f32.gmra.mxu0 %v390
      %v519 = vpop.f32.mrf.mxu0
      %v520 = vadd.f32 %v375, %v519
      %v521 = vpop.f32.mrf.mxu0
      %522 = vmatprep.mubr.f32.mxu0 0.0
      %523 = vmatmul.mubr.f32.gmra.mxu0 %v393
      %v524 = vpop.f32.mrf.mxu0
      %v525 = vadd.f32 %v380, %v524
      %v526 = vpop.f32.mrf.mxu0
      %527 = vdwg.mxu0
      %v528 = vmul.f32 %v510, 0.5
      %v529 = vmul.f32 %v515, 0.5
      %v530 = vmul.f32 %v520, 0.5
      %v531 = vmul.f32 %v525, 0.5
      %v532 = vmul.f32 %v510, 0.70710677
      %v533 = vmul.f32 %v515, 0.70710677
      %v534 = vmul.f32 %v520, 0.70710677
      %v535 = vmul.f32 %v525, 0.70710677
      %vm536 = vcmp.ge.f32.partialorder %v532, 0.0
      %vm537 = vcmp.ge.f32.partialorder %v533, 0.0
      %vm538 = vcmp.ge.f32.partialorder %v534, 0.0
      %vm539 = vcmp.ge.f32.partialorder %v535, 0.0
      %v540 = vsel %vm536, 1.0, -1.0
      %v541 = vsel %vm537, 1.0, -1.0
      %v542 = vsel %vm538, 1.0, -1.0
      %v543 = vsel %vm539, 1.0, -1.0
      %v544 = vand.u32 2147483647, %v532
      %v545 = vand.u32 2147483647, %v533
      %v546 = vand.u32 2147483647, %v534
      %v547 = vand.u32 2147483647, %v535
      %v548 = vmul.f32 %v544, 0.3275911
      %v549 = vmul.f32 %v545, 0.3275911
      %v550 = vmul.f32 %v546, 0.3275911
      %v551 = vmul.f32 %v547, 0.3275911
      %v552 = vadd.f32 %v548, 1.0
      %v553 = vadd.f32 %v549, 1.0
      %v554 = vadd.f32 %v550, 1.0
      %v555 = vadd.f32 %v551, 1.0
      %v556 = vrcp.pop %v552
      %v557 = vmul.f32 1.0, %v556
      %v558 = vrcp.pop %v553
      %v559 = vmul.f32 1.0, %v558
      %v560 = vrcp.pop %v554
      %v561 = vmul.f32 1.0, %v560
      %v562 = vrcp.pop %v555
      %v563 = vmul.f32 1.0, %v562
      %v564 = vmul.f32 %v557, 1.0614054
      %v565 = vmul.f32 %v559, 1.0614054
      %v566 = vmul.f32 %v561, 1.0614054
      %v567 = vmul.f32 %v563, 1.0614054
      %v568 = vadd.f32 %v564, -1.4531521
      %v569 = vadd.f32 %v565, -1.4531521
      %v570 = vadd.f32 %v566, -1.4531521
      %v571 = vadd.f32 %v567, -1.4531521
      %v572 = vmul.f32 %v568, %v557
      %v573 = vmul.f32 %v569, %v559
      %v574 = vmul.f32 %v570, %v561
      %v575 = vmul.f32 %v571, %v563
      %v576 = vadd.f32 %v572, 1.4214138
      %v577 = vadd.f32 %v573, 1.4214138
      %v578 = vadd.f32 %v574, 1.4214138
      %v579 = vadd.f32 %v575, 1.4214138
      %v580 = vmul.f32 %v576, %v557
      %v581 = vmul.f32 %v577, %v559
      %v582 = vmul.f32 %v578, %v561
      %v583 = vmul.f32 %v579, %v563
      %v584 = vadd.f32 %v580, -0.28449672
      %v585 = vadd.f32 %v581, -0.28449672
      %v586 = vadd.f32 %v582, -0.28449672
      %v587 = vadd.f32 %v583, -0.28449672
      %v588 = vmul.f32 %v584, %v557
      %v589 = vmul.f32 %v585, %v559
      %v590 = vmul.f32 %v586, %v561
      %v591 = vmul.f32 %v587, %v563
      %v592 = vadd.f32 %v588, 0.2548296
      %v593 = vadd.f32 %v589, 0.2548296
      %v594 = vadd.f32 %v590, 0.2548296
      %v595 = vadd.f32 %v591, 0.2548296
      %v596 = vmul.f32 %v592, %v557
      %v597 = vmul.f32 %v593, %v559
      %v598 = vmul.f32 %v594, %v561
      %v599 = vmul.f32 %v595, %v563
      %v600 = vsub.f32 0.0, %v544
      %v601 = vsub.f32 0.0, %v545
      %v602 = vsub.f32 0.0, %v546
      %v603 = vsub.f32 0.0, %v547
      %v604 = vmul.f32 %v600, %v544
      %v605 = vmul.f32 %v601, %v545
      %v606 = vmul.f32 %v602, %v546
      %v607 = vmul.f32 %v603, %v547
      %v608 = vmul.f32 %v604, 1.442695
      %v609 = vpow.pop %v608
      %v610 = vmul.f32 %v605, 1.442695
      %v611 = vpow.pop %v610
      %v612 = vmul.f32 %v606, 1.442695
      %v613 = vpow.pop %v612
      %v614 = vmul.f32 %v607, 1.442695
      %v615 = vpow.pop %v614
      %v616 = vmul.f32 %v596, %v609
      %v617 = vmul.f32 %v597, %v611
      %v618 = vmul.f32 %v598, %v613
      %v619 = vmul.f32 %v599, %v615
      %v620 = vsub.f32 1.0, %v616
      %v621 = vsub.f32 1.0, %v617
      %v622 = vsub.f32 1.0, %v618
      %v623 = vsub.f32 1.0, %v619
      %v624 = vmul.f32 %v540, %v620
      %v625 = vmul.f32 %v541, %v621
      %v626 = vmul.f32 %v542, %v622
      %v627 = vmul.f32 %v543, %v623
      %v628 = vadd.f32 %v624, 1.0
      %v629 = vadd.f32 %v625, 1.0
      %v630 = vadd.f32 %v626, 1.0
      %v631 = vadd.f32 %v627, 1.0
      %v632 = vmul.f32 %v528, %v628
      %v633 = vmul.f32 %v529, %v629
      %v634 = vmul.f32 %v530, %v630
      %v635 = vmul.f32 %v531, %v631
      %v636 = vld [vmem:[%s3] sm:$0xff]
      %v637 = vld [vmem:[%s3 + $0x8] sm:$0xff]
      %v638 = vld [vmem:[%s3 + $0x10] sm:$0xff]
      %v639 = vld [vmem:[%s3 + $0x18] sm:$0xff]
      %v640 = vld [vmem:[%s4] sm:$0xff]
      %v641 = vld [vmem:[%s4 + $0x8] sm:$0xff]
      %v642 = vld [vmem:[%s4 + $0x10] sm:$0xff]
      %v643 = vld [vmem:[%s4 + $0x18] sm:$0xff]
      %645 = vset.pattern.permute.xlu0 0
      %646 = vperm.xlu0 %645, %v640
      %v647 = vpop.permute.xlu0 %646
      %650 = vset.pattern.permute.xlu0 0
      %651 = vperm.xlu0 %650, %v641
      %v652 = vpop.permute.xlu0 %651
      %655 = vset.pattern.permute.xlu0 0
      %656 = vperm.xlu0 %655, %v642
      %v657 = vpop.permute.xlu0 %656
      %660 = vset.pattern.permute.xlu0 0
      %661 = vperm.xlu0 %660, %v643
      %v662 = vpop.permute.xlu0 %661
      %vm664 = vcmask 261120
      %v666 = vsel %vm664, %v636, 0
      %v669 = vsel %vm664, %v637, 0
      %v672 = vsel %vm664, %v638, 0
      %v675 = vsel %vm664, %v639, 0
      %677 = vmatprep.subr.mxu0 0.0
      %678 = vmatpush1.msra.mxu0 0.0
      %679 = vmatprep.subr.mxu0 0.0
      %680 = vmatpush1.msra.mxu0 0.0
      %681 = vmatprep.subr.mxu0 0.0
      %682 = vmatpush1.msra.mxu0 0.0
      %683 = vmatprep.subr.mxu0 0.0
      %684 = vmatpush1.msra.mxu0 0.0
      %685 = vmatprep.subr.mxu0 0.0
      %686 = vmatpush1.msra.mxu0 0.0
      %687 = vmatprep.subr.mxu0 0.0
      %688 = vmatpush1.msra.mxu0 0.0
      %689 = vmatprep.subr.mxu0 0.0
      %690 = vmatpush1.msra.mxu0 0.0
      %691 = vmatprep.subr.mxu0 0.0
      %692 = vmatpush1.msra.mxu0 0.0
      %693 = vmatprep.subr.mxu0 0.0
      %694 = vmatpush1.msra.mxu0 0.0
      %695 = vmatprep.subr.mxu0 0.0
      %696 = vmatpush1.msra.mxu0 0.0
      %697 = vmatprep.subr.mxu0 0.0
      %698 = vmatpush1.msra.mxu0 0.0
      %699 = vmatprep.subr.mxu0 0.0
      %700 = vmatpush1.msra.mxu0 0.0
      %701 = vmatprep.subr.mxu0 0.0
      %702 = vmatpush1.msra.mxu0 %v635
      %703 = vmatprep.subr.mxu0 0.0
      %704 = vmatpush1.msra.mxu0 %v634
      %705 = vmatprep.subr.mxu0 0.0
      %706 = vmatpush1.msra.mxu0 %v633
      %707 = vmatprep.subr.mxu0 0.0
      %708 = vmatpush1.msra.mxu0 %v632
      %709 = vmatprep.subr.mxu0 0.0
      %710 = vmatpush2.msra.mxu0 0.0
      %711 = vmatprep.subr.mxu0 0.0
      %712 = vmatpush2.msra.mxu0 0.0
      %713 = vmatprep.subr.mxu0 0.0
      %714 = vmatpush2.msra.mxu0 0.0
      %715 = vmatprep.subr.mxu0 0.0
      %716 = vmatpush2.msra.mxu0 0.0
      %717 = vmatprep.subr.mxu0 0.0
      %718 = vmatpush2.msra.mxu0 0.0
      %719 = vmatprep.subr.mxu0 0.0
      %720 = vmatpush2.msra.mxu0 0.0
      %721 = vmatprep.subr.mxu0 0.0
      %722 = vmatpush2.msra.mxu0 0.0
      %723 = vmatprep.subr.mxu0 0.0
      %724 = vmatpush2.msra.mxu0 0.0
      %725 = vmatprep.subr.mxu0 0.0
      %726 = vmatpush2.msra.mxu0 0.0
      %727 = vmatprep.subr.mxu0 0.0
      %728 = vmatpush2.msra.mxu0 0.0
      %729 = vmatprep.subr.mxu0 0.0
      %730 = vmatpush2.msra.mxu0 0.0
      %731 = vmatprep.subr.mxu0 0.0
      %732 = vmatpush2.msra.mxu0 0.0
      %733 = vmatprep.subr.mxu0 0.0
      %734 = vmatpush2.msra.mxu0 0.0
      %735 = vmatprep.subr.mxu0 0.0
      %736 = vmatpush2.msra.mxu0 0.0
      %737 = vmatprep.subr.mxu0 0.0
      %738 = vmatpush2.msra.mxu0 0.0
      %739 = vmatprep.subr.mxu0 0.0
      %740 = vmatpush2.msra.mxu0 0.0
      %741 = vmatprep.mubr.f32.mxu0 0.0
      %742 = vmatmul.mubr.f32.gmra.mxu0 %v666
      %v743 = vpop.f32.mrf.mxu0
      %v744 = vadd.f32 %v647, %v743
      %v745 = vpop.f32.mrf.mxu0
      %746 = vmatprep.mubr.f32.mxu0 0.0
      %747 = vmatmul.mubr.f32.gmra.mxu0 %v669
      %v748 = vpop.f32.mrf.mxu0
      %v749 = vadd.f32 %v652, %v748
      %v750 = vpop.f32.mrf.mxu0
      %751 = vmatprep.mubr.f32.mxu0 0.0
      %752 = vmatmul.mubr.f32.gmra.mxu0 %v672
      %v753 = vpop.f32.mrf.mxu0
      %v754 = vadd.f32 %v657, %v753
      %v755 = vpop.f32.mrf.mxu0
      %756 = vmatprep.mubr.f32.mxu0 0.0
      %757 = vmatmul.mubr.f32.gmra.mxu0 %v675
      %v758 = vpop.f32.mrf.mxu0
      %v759 = vadd.f32 %v662, %v758
      %v760 = vpop.f32.mrf.mxu0
      %761 = vdwg.mxu0
      %v762 = vmul.f32 %v744, 0.5
      %v763 = vmul.f32 %v749, 0.5
      %v764 = vmul.f32 %v754, 0.5
      %v765 = vmul.f32 %v759, 0.5
      %v766 = vmul.f32 %v744, 0.70710677
      %v767 = vmul.f32 %v749, 0.70710677
      %v768 = vmul.f32 %v754, 0.70710677
      %v769 = vmul.f32 %v759, 0.70710677
      %vm770 = vcmp.ge.f32.partialorder %v766, 0.0
      %vm771 = vcmp.ge.f32.partialorder %v767, 0.0
      %vm772 = vcmp.ge.f32.partialorder %v768, 0.0
      %vm773 = vcmp.ge.f32.partialorder %v769, 0.0
      %v774 = vsel %vm770, 1.0, -1.0
      %v775 = vsel %vm771, 1.0, -1.0
      %v776 = vsel %vm772, 1.0, -1.0
      %v777 = vsel %vm773, 1.0, -1.0
      %v778 = vand.u32 2147483647, %v766
      %v779 = vand.u32 2147483647, %v767
      %v780 = vand.u32 2147483647, %v768
      %v781 = vand.u32 2147483647, %v769
      %v782 = vmul.f32 %v778, 0.3275911
      %v783 = vmul.f32 %v779, 0.3275911
      %v784 = vmul.f32 %v780, 0.3275911
      %v785 = vmul.f32 %v781, 0.3275911
      %v786 = vadd.f32 %v782, 1.0
      %v787 = vadd.f32 %v783, 1.0
      %v788 = vadd.f32 %v784, 1.0
      %v789 = vadd.f32 %v785, 1.0
      %v790 = vrcp.pop %v786
      %v791 = vmul.f32 1.0, %v790
      %v792 = vrcp.pop %v787
      %v793 = vmul.f32 1.0, %v792
      %v794 = vrcp.pop %v788
      %v795 = vmul.f32 1.0, %v794
      %v796 = vrcp.pop %v789
      %v797 = vmul.f32 1.0, %v796
      %v798 = vmul.f32 %v791, 1.0614054
      %v799 = vmul.f32 %v793, 1.0614054
      %v800 = vmul.f32 %v795, 1.0614054
      %v801 = vmul.f32 %v797, 1.0614054
      %v802 = vadd.f32 %v798, -1.4531521
      %v803 = vadd.f32 %v799, -1.4531521
      %v804 = vadd.f32 %v800, -1.4531521
      %v805 = vadd.f32 %v801, -1.4531521
      %v806 = vmul.f32 %v802, %v791
      %v807 = vmul.f32 %v803, %v793
      %v808 = vmul.f32 %v804, %v795
      %v809 = vmul.f32 %v805, %v797
      %v810 = vadd.f32 %v806, 1.4214138
      %v811 = vadd.f32 %v807, 1.4214138
      %v812 = vadd.f32 %v808, 1.4214138
      %v813 = vadd.f32 %v809, 1.4214138
      %v814 = vmul.f32 %v810, %v791
      %v815 = vmul.f32 %v811, %v793
      %v816 = vmul.f32 %v812, %v795
      %v817 = vmul.f32 %v813, %v797
      %v818 = vadd.f32 %v814, -0.28449672
      %v819 = vadd.f32 %v815, -0.28449672
      %v820 = vadd.f32 %v816, -0.28449672
      %v821 = vadd.f32 %v817, -0.28449672
      %v822 = vmul.f32 %v818, %v791
      %v823 = vmul.f32 %v819, %v793
      %v824 = vmul.f32 %v820, %v795
      %v825 = vmul.f32 %v821, %v797
      %v826 = vadd.f32 %v822, 0.2548296
      %v827 = vadd.f32 %v823, 0.2548296
      %v828 = vadd.f32 %v824, 0.2548296
      %v829 = vadd.f32 %v825, 0.2548296
      %v830 = vmul.f32 %v826, %v791
      %v831 = vmul.f32 %v827, %v793
      %v832 = vmul.f32 %v828, %v795
      %v833 = vmul.f32 %v829, %v797
      %v834 = vsub.f32 0.0, %v778
      %v835 = vsub.f32 0.0, %v779
      %v836 = vsub.f32 0.0, %v780
      %v837 = vsub.f32 0.0, %v781
      %v838 = vmul.f32 %v834, %v778
      %v839 = vmul.f32 %v835, %v779
      %v840 = vmul.f32 %v836, %v780
      %v841 = vmul.f32 %v837, %v781
      %v842 = vmul.f32 %v838, 1.442695
      %v843 = vpow.pop %v842
      %v844 = vmul.f32 %v839, 1.442695
      %v845 = vpow.pop %v844
      %v846 = vmul.f32 %v840, 1.442695
      %v847 = vpow.pop %v846
      %v848 = vmul.f32 %v841, 1.442695
      %v849 = vpow.pop %v848
      %v850 = vmul.f32 %v830, %v843
      %v851 = vmul.f32 %v831, %v845
      %v852 = vmul.f32 %v832, %v847
      %v853 = vmul.f32 %v833, %v849
      %v854 = vsub.f32 1.0, %v850
      %v855 = vsub.f32 1.0, %v851
      %v856 = vsub.f32 1.0, %v852
      %v857 = vsub.f32 1.0, %v853
      %v858 = vmul.f32 %v774, %v854
      %v859 = vmul.f32 %v775, %v855
      %v860 = vmul.f32 %v776, %v856
      %v861 = vmul.f32 %v777, %v857
      %v862 = vadd.f32 %v858, 1.0
      %v863 = vadd.f32 %v859, 1.0
      %v864 = vadd.f32 %v860, 1.0
      %v865 = vadd.f32 %v861, 1.0
      %v866 = vmul.f32 %v762, %v862
      %v867 = vmul.f32 %v763, %v863
      %v868 = vmul.f32 %v764, %v864
      %v869 = vmul.f32 %v765, %v865
      %v870 = vld [vmem:[%s5] sm:$0xff]
      %v871 = vld [vmem:[%s5 + $0x8] sm:$0xff]
      %v872 = vld [vmem:[%s5 + $0x10] sm:$0xff]
      %v873 = vld [vmem:[%s5 + $0x18] sm:$0xff]
      %v874 = vld [vmem:[%s6] sm:$0x1]
      %v876 = vlaneseq
      %v877 = vshrl.u32 %v876, 7
      %v878 = vsub.s32 0, %v877
      %v879 = vrot.slane %v874, %v878
      %881 = vxpose.xlu0.b32.start [1/16] %v866, 128
      %882 = vxpose.xlu0.b32.cont [2/16] %v867, 128
      %883 = vxpose.xlu0.b32.cont [3/16] %v868, 128
      %884 = vxpose.xlu0.b32.cont [4/16] %v869, 128
      %885 = vxpose.xlu0.b32.cont [5/16] 0.0, 128
      %886 = vxpose.xlu0.b32.cont [6/16] 0.0, 128
      %887 = vxpose.xlu0.b32.cont [7/16] 0.0, 128
      %888 = vxpose.xlu0.b32.cont [8/16] 0.0, 128
      %889 = vxpose.xlu0.b32.cont [9/16] 0.0, 128
      %890 = vxpose.xlu0.b32.cont [10/16] 0.0, 128
      %891 = vxpose.xlu0.b32.cont [11/16] 0.0, 128
      %892 = vxpose.xlu0.b32.cont [12/16] 0.0, 128
      %893 = vxpose.xlu0.b32.cont [13/16] 0.0, 128
      %894 = vxpose.xlu0.b32.cont [14/16] 0.0, 128
      %895 = vxpose.xlu0.b32.cont [15/16] 0.0, 128
      %896 = vxpose.xlu0.b32.end [16/16] 0.0, 128
      %v897 = vpop.trf.xlu0
      %v898 = vpop.trf.xlu0
      %v899 = vpop.trf.xlu0
      %v900 = vpop.trf.xlu0
      %v901 = vpop.trf.xlu0
      %v902 = vpop.trf.xlu0
      %v903 = vpop.trf.xlu0
      %v904 = vpop.trf.xlu0
      %v905 = vpop.trf.xlu0
      %v906 = vpop.trf.xlu0
      %v907 = vpop.trf.xlu0
      %v908 = vpop.trf.xlu0
      %v909 = vpop.trf.xlu0
      %v910 = vpop.trf.xlu0
      %v911 = vpop.trf.xlu0
      %v912 = vpop.trf.xlu0
      %v914 = vsel %vm664, %v897, 0
      %v917 = vsel %vm664, %v898, 0
      %v920 = vsel %vm664, %v899, 0
      %v923 = vsel %vm664, %v900, 0
      %v926 = vsel %vm664, %v901, 0
      %v929 = vsel %vm664, %v902, 0
      %v932 = vsel %vm664, %v903, 0
      %v935 = vsel %vm664, %v904, 0
      %v938 = vsel %vm664, %v905, 0
      %v941 = vsel %vm664, %v906, 0
      %v944 = vsel %vm664, %v907, 0
      %v947 = vsel %vm664, %v908, 0
      %v950 = vsel %vm664, %v909, 0
      %v953 = vsel %vm664, %v910, 0
      %v956 = vsel %vm664, %v911, 0
      %v959 = vsel %vm664, %v912, 0
      %961 = vmatprep.subr.mxu0 0.0
      %962 = vmatpush1.msra.mxu0 0.0
      %963 = vmatprep.subr.mxu0 0.0
      %964 = vmatpush1.msra.mxu0 0.0
      %965 = vmatprep.subr.mxu0 0.0
      %966 = vmatpush1.msra.mxu0 0.0
      %967 = vmatprep.subr.mxu0 0.0
      %968 = vmatpush1.msra.mxu0 0.0
      %969 = vmatprep.subr.mxu0 0.0
      %970 = vmatpush1.msra.mxu0 0.0
      %971 = vmatprep.subr.mxu0 0.0
      %972 = vmatpush1.msra.mxu0 0.0
      %973 = vmatprep.subr.mxu0 0.0
      %974 = vmatpush1.msra.mxu0 0.0
      %975 = vmatprep.subr.mxu0 0.0
      %976 = vmatpush1.msra.mxu0 0.0
      %977 = vmatprep.subr.mxu0 0.0
      %978 = vmatpush1.msra.mxu0 0.0
      %979 = vmatprep.subr.mxu0 0.0
      %980 = vmatpush1.msra.mxu0 0.0
      %981 = vmatprep.subr.mxu0 0.0
      %982 = vmatpush1.msra.mxu0 0.0
      %983 = vmatprep.subr.mxu0 0.0
      %984 = vmatpush1.msra.mxu0 0.0
      %985 = vmatprep.subr.mxu0 0.0
      %986 = vmatpush1.msra.mxu0 %v873
      %987 = vmatprep.subr.mxu0 0.0
      %988 = vmatpush1.msra.mxu0 %v872
      %989 = vmatprep.subr.mxu0 0.0
      %990 = vmatpush1.msra.mxu0 %v871
      %991 = vmatprep.subr.mxu0 0.0
      %992 = vmatpush1.msra.mxu0 %v870
      %993 = vmatprep.subr.mxu0 0.0
      %994 = vmatpush2.msra.mxu0 0.0
      %995 = vmatprep.subr.mxu0 0.0
      %996 = vmatpush2.msra.mxu0 0.0
      %997 = vmatprep.subr.mxu0 0.0
      %998 = vmatpush2.msra.mxu0 0.0
      %999 = vmatprep.subr.mxu0 0.0
      %1000 = vmatpush2.msra.mxu0 0.0
      %1001 = vmatprep.subr.mxu0 0.0
      %1002 = vmatpush2.msra.mxu0 0.0
      %1003 = vmatprep.subr.mxu0 0.0
      %1004 = vmatpush2.msra.mxu0 0.0
      %1005 = vmatprep.subr.mxu0 0.0
      %1006 = vmatpush2.msra.mxu0 0.0
      %1007 = vmatprep.subr.mxu0 0.0
      %1008 = vmatpush2.msra.mxu0 0.0
      %1009 = vmatprep.subr.mxu0 0.0
      %1010 = vmatpush2.msra.mxu0 0.0
      %1011 = vmatprep.subr.mxu0 0.0
      %1012 = vmatpush2.msra.mxu0 0.0
      %1013 = vmatprep.subr.mxu0 0.0
      %1014 = vmatpush2.msra.mxu0 0.0
      %1015 = vmatprep.subr.mxu0 0.0
      %1016 = vmatpush2.msra.mxu0 0.0
      %1017 = vmatprep.subr.mxu0 0.0
      %1018 = vmatpush2.msra.mxu0 0.0
      %1019 = vmatprep.subr.mxu0 0.0
      %1020 = vmatpush2.msra.mxu0 0.0
      %1021 = vmatprep.subr.mxu0 0.0
      %1022 = vmatpush2.msra.mxu0 0.0
      %1023 = vmatprep.subr.mxu0 0.0
      %1024 = vmatpush2.msra.mxu0 0.0
      %1025 = vmatprep.mubr.f32.mxu0 0.0
      %1026 = vmatmul.mubr.f32.gmra.mxu0 %v914
      %v1027 = vpop.f32.mrf.mxu0
      %v1028 = vadd.f32 %v879, %v1027
      %v1029 = vpop.f32.mrf.mxu0
      %1030 = vmatprep.mubr.f32.mxu0 0.0
      %1031 = vmatmul.mubr.f32.gmra.mxu0 %v917
      %v1032 = vpop.f32.mrf.mxu0
      %v1033 = vadd.f32 %v879, %v1032
      %v1034 = vpop.f32.mrf.mxu0
      %1035 = vmatprep.mubr.f32.mxu0 0.0
      %1036 = vmatmul.mubr.f32.gmra.mxu0 %v920
      %v1037 = vpop.f32.mrf.mxu0
      %v1038 = vadd.f32 %v879, %v1037
      %v1039 = vpop.f32.mrf.mxu0
      %1040 = vmatprep.mubr.f32.mxu0 0.0
      %1041 = vmatmul.mubr.f32.gmra.mxu0 %v923
      %v1042 = vpop.f32.mrf.mxu0
      %v1043 = vadd.f32 %v879, %v1042
      %v1044 = vpop.f32.mrf.mxu0
      %1045 = vmatprep.mubr.f32.mxu0 0.0
      %1046 = vmatmul.mubr.f32.gmra.mxu0 %v926
      %v1047 = vpop.f32.mrf.mxu0
      %v1048 = vadd.f32 %v879, %v1047
      %v1049 = vpop.f32.mrf.mxu0
      %1050 = vmatprep.mubr.f32.mxu0 0.0
      %1051 = vmatmul.mubr.f32.gmra.mxu0 %v929
      %v1052 = vpop.f32.mrf.mxu0
      %v1053 = vadd.f32 %v879, %v1052
      %v1054 = vpop.f32.mrf.mxu0
      %1055 = vmatprep.mubr.f32.mxu0 0.0
      %1056 = vmatmul.mubr.f32.gmra.mxu0 %v932
      %v1057 = vpop.f32.mrf.mxu0
      %v1058 = vadd.f32 %v879, %v1057
      %v1059 = vpop.f32.mrf.mxu0
      %1060 = vmatprep.mubr.f32.mxu0 0.0
      %1061 = vmatmul.mubr.f32.gmra.mxu0 %v935
      %v1062 = vpop.f32.mrf.mxu0
      %v1063 = vadd.f32 %v879, %v1062
      %v1064 = vpop.f32.mrf.mxu0
      %1065 = vmatprep.mubr.f32.mxu0 0.0
      %1066 = vmatmul.mubr.f32.gmra.mxu0 %v938
      %v1067 = vpop.f32.mrf.mxu0
      %v1068 = vadd.f32 %v879, %v1067
      %v1069 = vpop.f32.mrf.mxu0
      %1070 = vmatprep.mubr.f32.mxu0 0.0
      %1071 = vmatmul.mubr.f32.gmra.mxu0 %v941
      %v1072 = vpop.f32.mrf.mxu0
      %v1073 = vadd.f32 %v879, %v1072
      %v1074 = vpop.f32.mrf.mxu0
      %1075 = vmatprep.mubr.f32.mxu0 0.0
      %1076 = vmatmul.mubr.f32.gmra.mxu0 %v944
      %v1077 = vpop.f32.mrf.mxu0
      %v1078 = vadd.f32 %v879, %v1077
      %v1079 = vpop.f32.mrf.mxu0
      %1080 = vmatprep.mubr.f32.mxu0 0.0
      %1081 = vmatmul.mubr.f32.gmra.mxu0 %v947
      %v1082 = vpop.f32.mrf.mxu0
      %v1083 = vadd.f32 %v879, %v1082
      %v1084 = vpop.f32.mrf.mxu0
      %1085 = vmatprep.mubr.f32.mxu0 0.0
      %1086 = vmatmul.mubr.f32.gmra.mxu0 %v950
      %v1087 = vpop.f32.mrf.mxu0
      %v1088 = vadd.f32 %v879, %v1087
      %v1089 = vpop.f32.mrf.mxu0
      %1090 = vmatprep.mubr.f32.mxu0 0.0
      %1091 = vmatmul.mubr.f32.gmra.mxu0 %v953
      %v1092 = vpop.f32.mrf.mxu0
      %v1093 = vadd.f32 %v879, %v1092
      %v1094 = vpop.f32.mrf.mxu0
      %1095 = vmatprep.mubr.f32.mxu0 0.0
      %1096 = vmatmul.mubr.f32.gmra.mxu0 %v956
      %v1097 = vpop.f32.mrf.mxu0
      %v1098 = vadd.f32 %v879, %v1097
      %v1099 = vpop.f32.mrf.mxu0
      %1100 = vmatprep.mubr.f32.mxu0 0.0
      %1101 = vmatmul.mubr.f32.gmra.mxu0 %v959
      %v1102 = vpop.f32.mrf.mxu0
      %v1103 = vadd.f32 %v879, %v1102
      %v1104 = vpop.f32.mrf.mxu0
      %1105 = vdwg.mxu0
      %1106 = vst.msk [vmem:[%s336] sm:$0xff] %vm382, %v1028
      %1107 = vst.msk [vmem:[%s336 + $0x8] sm:$0xff] %vm382, %v1033
      %1108 = vst.msk [vmem:[%s336 + $0x10] sm:$0xff] %vm382, %v1038
      %1109 = vst.msk [vmem:[%s336 + $0x18] sm:$0xff] %vm382, %v1043
      %1110 = vst.msk [vmem:[%s336 + $0x20] sm:$0xff] %vm382, %v1048
      %1111 = vst.msk [vmem:[%s336 + $0x28] sm:$0xff] %vm382, %v1053
      %1112 = vst.msk [vmem:[%s336 + $0x30] sm:$0xff] %vm382, %v1058
      %1113 = vst.msk [vmem:[%s336 + $0x38] sm:$0xff] %vm382, %v1063
      %1114 = vst.msk [vmem:[%s336 + $0x40] sm:$0xff] %vm382, %v1068
      %1115 = vst.msk [vmem:[%s336 + $0x48] sm:$0xff] %vm382, %v1073
      %1116 = vst.msk [vmem:[%s336 + $0x50] sm:$0xff] %vm382, %v1078
      %1117 = vst.msk [vmem:[%s336 + $0x58] sm:$0xff] %vm382, %v1083
      %1118 = vst.msk [vmem:[%s336 + $0x60] sm:$0xff] %vm382, %v1088
      %1119 = vst.msk [vmem:[%s336 + $0x68] sm:$0xff] %vm382, %v1093
      %1120 = vst.msk [vmem:[%s336 + $0x70] sm:$0xff] %vm382, %v1098
      %1121 = vst.msk [vmem:[%s336 + $0x78] sm:$0xff] %vm382, %v1103
      %s1122 = smul.u32 16, %s23
      %p1123 = scmp.lt.s32.totalorder %s22, 1
      %s1124 = scalar_select %p1123, %s22, 1
      %p1125 = scmp.lt.s32.totalorder %s1122, 15
      %s1126 = scalar_select %p1125, %s1122, 15
      %s1127 = smul.addr %s1124, 16
      %s1128 = sadd.s32 %s1126, %s1127
      %s1129 = smul.addr %s1128, 8
      %s1130 = scalar_lea.vmem %s7, %s1129
      // Predicated region
      $region49: #{tpu_custom_call.1} parent=47 // pred_check
        %p1131 = pneg %p209
      $region50: #{tpu_custom_call.1} parent=47 // pred_check_branch
        %1133 = sbr.rel (%p1131) target = $region52
      $region51: #{tpu_custom_call.1} parent=47 // pred_region
        %s1134 = smul.u32 16, %s23
      $region52: #{tpu_custom_call.1} parent=47 // pred_fallthru
        _
    $region48: #{tpu_custom_call.1} parent=5 // pred_fallthru
      _
    %p1135 = scmp.le.s32.totalorder 2, %s13
    // Predicated region
    $region53: #{tpu_custom_call.1} parent=5 // pred_check
      %p1136 = pneg %p1135
    $region54: #{tpu_custom_call.1} parent=5 // pred_check_branch
      %1138 = sbr.rel (%p1136) target = $region56
    $region55: #{tpu_custom_call.1} parent=5 // pred_region
      %s1139 = ssub.s32 %s13, 2
      // Predicated region
      $region57: #{tpu_custom_call.1} parent=55 // pred_check
        %p1140 = pneg %p215
      $region58: #{tpu_custom_call.1} parent=55 // pred_check_branch
        %1142 = sbr.rel (%p1140) target = $region60
      $region59: #{tpu_custom_call.1} parent=55 // pred_region
        %s1143 = smul.u32 16, %s25
        %p1144 = scmp.lt.s32.totalorder %s24, 1
        %s1145 = scalar_select %p1144, %s24, 1
        %p1146 = scmp.lt.s32.totalorder %s1143, 15
        %s1147 = scalar_select %p1146, %s1143, 15
        %s1148 = smul.addr %s1145, 16
        %s1149 = sadd.s32 %s1147, %s1148
        %s1150 = smul.addr %s1149, 8
        %s1151 = scalar_lea.vmem %s7, %s1150
      $region60: #{tpu_custom_call.1} parent=55 // pred_fallthru
        _
    $region56: #{tpu_custom_call.1} parent=5 // pred_fallthru
      _
  $region6: #{tpu_custom_call.1} parent=0 // loop_footer
    %s17 = sadd.s32 1, %s13
  $region7: #{tpu_custom_call.1} parent=0 // loop_footer_branch
    %12 = sbr.rel target = $region3
  $region8: #{tpu_custom_call.1} parent=0 // loop_exit
    _

</llo_original>
